<compile_context>
chip_gen: v7x
topology: tpu7x:2x2x1
jax: 0.10.0
libtpu: 0.0.40
codegen_flags: <defaults>
</compile_context>

<pallas_src>
import jax
import jax.numpy as jnp
from jax import lax
from jax.experimental import pallas as pl
from jax.experimental.pallas import tpu as pltpu


# ----------------------------------------------------------------------------
# Kernel
# ----------------------------------------------------------------------------
def _mlp_kernel(x_ref, w1_ref, b1_ref, w2_ref, b2_ref, w3_ref, b3_ref, o_ref):
    x = x_ref[...]                                      # (TB, D) f32

    # Layer 1 on the MXU: contract D of W1 (16, D) with D of x (TB, D)
    # (same pattern as q @ k^T) -> (16, TB); batch sits on the lane axis.
    h1 = lax.dot_general(
        w1_ref[...], x,
        dimension_numbers=(((1,), (1,)), ((), ())),
        preferred_element_type=jnp.float32)
    h1 = jnp.maximum(h1 + b1_ref[...], 0.0)             # (16, TB)

    # Layer 2 on the MXU: (8, 16) @ (16, TB) -> (8, TB)
    h2 = jnp.dot(w2_ref[...], h1, preferred_element_type=jnp.float32)
    h2 = jnp.maximum(h2 + b2_ref[...], 0.0)             # (8, TB)

    # Layer 3 (8 -> 1) on the VPU + sublane reduce; avoids a width-1 MXU matmul.
    o = jnp.sum(h2 * w3_ref[...], axis=0, keepdims=True) + b3_ref[...]  # (1, TB)

    o_ref[...] = o.astype(o_ref.dtype)


# ----------------------------------------------------------------------------
# Wrapper
# ----------------------------------------------------------------------------
def _round_up(x, m):
    return ((x + m - 1) // m) * m


_TB_MAX = 4096                       # rows-per-tile cap (multiple of 128)
_X_TILE_TARGET = 2 * 1024 * 1024     # ~2 MiB per x tile (4 MiB double-buffered)


def _pick_row_tile(batch, d):
    """Row tile: multiple of 128 (lane-dense output), ~2 MiB of x per tile."""
    per_row_bytes = d * 4
    tb = _X_TILE_TARGET // max(1, per_row_bytes)
    tb = (tb // 128) * 128
    tb = max(128, min(_TB_MAX, tb))
    # Never bigger than the (128-rounded) batch itself.
    tb = min(tb, _round_up(batch, 128))
    return tb


def lmodel_forward(x, params):
    """x: (B, D) float32 -> (B,) float32 (matches Lmodel.forward)."""
    w1, b1, w2, b2, w3, b3 = params     # torch-native shapes
    B, D = x.shape

    TB = _pick_row_tile(B, D)
    B_pad = _round_up(B, TB)
    G = B_pad // TB
    if B_pad != B:
        x = jnp.pad(x, ((0, B_pad - B), (0, 0)))

    # Kernel-friendly layouts (tiny reshapes, done once outside the grid).
    b1c = b1.reshape(16, 1)
    b2c = b2.reshape(8, 1)
    w3c = w3.reshape(8, 1)              # column vector for the VPU layer
    b3c = b3.reshape(1, 1)

    flops = 2 * B_pad * (D * 16 + 16 * 8 + 8)
    bytes_accessed = (B_pad * D + B_pad
                      + w1.size + w2.size + w3.size + 16 + 8 + 1) * 4

    out = pl.pallas_call(
        _mlp_kernel,
        out_shape=jax.ShapeDtypeStruct((1, B_pad), jnp.float32),
        grid_spec=pltpu.PrefetchScalarGridSpec(
            num_scalar_prefetch=0,
            grid=(G,),
            in_specs=[
                pl.BlockSpec((TB, D), lambda i: (i, 0)),    # x: streamed row tiles
                pl.BlockSpec((16, D), lambda i: (0, 0)),    # W1: resident
                pl.BlockSpec((16, 1), lambda i: (0, 0)),    # b1
                pl.BlockSpec((8, 16), lambda i: (0, 0)),    # W2
                pl.BlockSpec((8, 1), lambda i: (0, 0)),     # b2
                pl.BlockSpec((8, 1), lambda i: (0, 0)),     # w3 (column)
                pl.BlockSpec((1, 1), lambda i: (0, 0)),     # b3
            ],
            out_specs=pl.BlockSpec((1, TB), lambda i: (0, i)),  # lane-dense slab
        ),
        compiler_params=pltpu.CompilerParams(
            dimension_semantics=("parallel",),
            vmem_limit_bytes=32 * 1024 * 1024,
        ),
        cost_estimate=pl.CostEstimate(
            flops=flops, transcendentals=0, bytes_accessed=bytes_accessed),
    )(x, w1, b1c, w2, b2c, w3c, b3c)

    return out[0, :B]                   # drop padding; == squeeze(1)


# ----------------------------------------------------------------------------
# Params (PyTorch nn.Linear layout: W is (out, in), b is (out,))
# ----------------------------------------------------------------------------
def init_params(input_dims, key):
    ks = jax.random.split(key, 6)
    w1 = jax.random.normal(ks[0], (16, input_dims), jnp.float32) * 0.1
    b1 = jax.random.normal(ks[1], (16,), jnp.float32) * 0.1
    w2 = jax.random.normal(ks[2], (8, 16), jnp.float32) * 0.1
    b2 = jax.random.normal(ks[3], (8,), jnp.float32) * 0.1
    w3 = jax.random.normal(ks[4], (1, 8), jnp.float32) * 0.1
    b3 = jax.random.normal(ks[5], (1,), jnp.float32) * 0.1
    return (w1, b1, w2, b2, w3, b3)


def _reference(x, params):
    w1, b1, w2, b2, w3, b3 = params
    h1 = jnp.maximum(x @ w1.T + b1, 0.0)
    h2 = jnp.maximum(h1 @ w2.T + b2, 0.0)
    return (h2 @ w3.T + b3)[:, 0]


if __name__ == "__main__":
    key = jax.random.PRNGKey(0)
    k_x, k_p = jax.random.split(key)

    batch, input_dims = 8, 32
    x = jax.random.normal(k_x, (batch, input_dims), jnp.float32)
    params = init_params(input_dims, k_p)

    y = lmodel_forward(x, params)
    y = jax.block_until_ready(y)

    y_ref = _reference(x, params)
    assert y.shape == (batch,)
    assert jnp.allclose(y, y_ref, atol=1e-5, rtol=1e-5)

    print("KERNEL_OK")
</pallas_src>

<mosaic_0001>
module attributes {stable_mosaic.version = 11 : i64} {
  func.func @_mlp_kernel(%arg0: i32, %arg1: memref<128x32xf32, #tpu.memory_space<vmem>>, %arg2: memref<16x32xf32, #tpu.memory_space<vmem>>, %arg3: memref<16x1xf32, #tpu.memory_space<vmem>>, %arg4: memref<8x16xf32, #tpu.memory_space<vmem>>, %arg5: memref<8x1xf32, #tpu.memory_space<vmem>>, %arg6: memref<8x1xf32, #tpu.memory_space<vmem>>, %arg7: memref<1x1xf32, #tpu.memory_space<vmem>>, %arg8: memref<1x128xf32, #tpu.memory_space<vmem>>) attributes {dimension_semantics = [#tpu.dimension_semantics<parallel>], iteration_bounds = array<i64: 1>, scalar_prefetch = 0 : i64, scratch_operands = 0 : i64, tpu.core_type = #tpu.core_type<tc>, window_params = [{transform_indices = @transform_0, window_bounds = array<i64: 128, 32>}, {pipeline_mode = #tpu.pipeline_mode<synchronous>, transform_indices = @transform_1, window_bounds = array<i64: 16, 32>}, {pipeline_mode = #tpu.pipeline_mode<synchronous>, transform_indices = @transform_2, window_bounds = array<i64: 16, 1>}, {pipeline_mode = #tpu.pipeline_mode<synchronous>, transform_indices = @transform_3, window_bounds = array<i64: 8, 16>}, {pipeline_mode = #tpu.pipeline_mode<synchronous>, transform_indices = @transform_4, window_bounds = array<i64: 8, 1>}, {pipeline_mode = #tpu.pipeline_mode<synchronous>, transform_indices = @transform_5, window_bounds = array<i64: 8, 1>}, {pipeline_mode = #tpu.pipeline_mode<synchronous>, transform_indices = @transform_6, window_bounds = array<i64: 1, 1>}, {transform_indices = @transform_7, window_bounds = array<i64: 1, 128>}]} {
    %c0 = arith.constant 0 : index
    %c0_0 = arith.constant 0 : index
    %0 = vector.load %arg1[%c0, %c0_0] : memref<128x32xf32, #tpu.memory_space<vmem>>, vector<128x32xf32>
    %c0_1 = arith.constant 0 : index
    %c0_2 = arith.constant 0 : index
    %1 = vector.load %arg2[%c0_1, %c0_2] : memref<16x32xf32, #tpu.memory_space<vmem>>, vector<16x32xf32>
    %cst = arith.constant dense<0.000000e+00> : vector<16x128xf32>
    %2 = tpu.matmul %1, %0, %cst {dimension_numbers = #tpu.dot_dimension_numbers<[1], [1], [0], [0], [0, 0, 1, 0], [], []>} : vector<16x32xf32>, vector<128x32xf32>, vector<16x128xf32> -> vector<16x128xf32>
    %c0_3 = arith.constant 0 : index
    %c0_4 = arith.constant 0 : index
    %3 = vector.load %arg3[%c0_3, %c0_4] : memref<16x1xf32, #tpu.memory_space<vmem>>, vector<16x1xf32>
    %4 = vector.broadcast %3 : vector<16x1xf32> to vector<16x128xf32>
    %5 = arith.addf %2, %4 : vector<16x128xf32>
    %cst_5 = arith.constant 0.000000e+00 : f32
    %6 = vector.broadcast %cst_5 : f32 to vector<16x128xf32>
    %7 = arith.maximumf %5, %6 : vector<16x128xf32>
    %c0_6 = arith.constant 0 : index
    %c0_7 = arith.constant 0 : index
    %8 = vector.load %arg4[%c0_6, %c0_7] : memref<8x16xf32, #tpu.memory_space<vmem>>, vector<8x16xf32>
    %cst_8 = arith.constant dense<0.000000e+00> : vector<8x128xf32>
    %9 = tpu.matmul %8, %7, %cst_8 {dimension_numbers = #tpu.dot_dimension_numbers<[1], [0], [0], [1], [0, 0, 1, 1], [], []>} : vector<8x16xf32>, vector<16x128xf32>, vector<8x128xf32> -> vector<8x128xf32>
    %c0_9 = arith.constant 0 : index
    %c0_10 = arith.constant 0 : index
    %10 = vector.load %arg5[%c0_9, %c0_10] : memref<8x1xf32, #tpu.memory_space<vmem>>, vector<8x1xf32>
    %11 = vector.broadcast %10 : vector<8x1xf32> to vector<8x128xf32>
    %12 = arith.addf %9, %11 : vector<8x128xf32>
    %cst_11 = arith.constant 0.000000e+00 : f32
    %13 = vector.broadcast %cst_11 : f32 to vector<8x128xf32>
    %14 = arith.maximumf %12, %13 : vector<8x128xf32>
    %c0_12 = arith.constant 0 : index
    %c0_13 = arith.constant 0 : index
    %15 = vector.load %arg6[%c0_12, %c0_13] : memref<8x1xf32, #tpu.memory_space<vmem>>, vector<8x1xf32>
    %16 = vector.broadcast %15 : vector<8x1xf32> to vector<8x128xf32>
    %17 = arith.mulf %14, %16 : vector<8x128xf32>
    %cst_14 = arith.constant dense<0.000000e+00> : vector<128xf32>
    %18 = vector.multi_reduction <add>, %17, %cst_14 [0] : vector<8x128xf32> to vector<128xf32>
    %19 = vector.shape_cast %18 : vector<128xf32> to vector<1x128xf32>
    %c0_15 = arith.constant 0 : index
    %c0_16 = arith.constant 0 : index
    %20 = vector.load %arg7[%c0_15, %c0_16] : memref<1x1xf32, #tpu.memory_space<vmem>>, vector<1x1xf32>
    %21 = vector.broadcast %20 : vector<1x1xf32> to vector<1x128xf32>
    %22 = arith.addf %19, %21 : vector<1x128xf32>
    %c0_17 = arith.constant 0 : index
    %c0_18 = arith.constant 0 : index
    %23 = vector.load %arg8[%c0_17, %c0_18] : memref<1x128xf32, #tpu.memory_space<vmem>>, vector<1x128xf32>
    tpu.vector_store %arg8[%c0_17, %c0_18], %22 {strides = array<i32>} : memref<1x128xf32, #tpu.memory_space<vmem>>, vector<1x128xf32>,
    return
  }
  func.func @transform_0(%arg0: i32) -> (i32, i32) {
    %c0_i32 = arith.constant 0 : i32
    %c0_i32_0 = arith.constant 0 : i32
    return %arg0, %c0_i32 : i32, i32
  }
  func.func @transform_1(%arg0: i32) -> (i32, i32) {
    %c0_i32 = arith.constant 0 : i32
    %c0_i32_0 = arith.constant 0 : i32
    %c0_i32_1 = arith.constant 0 : i32
    return %c0_i32, %c0_i32_0 : i32, i32
  }
  func.func @transform_2(%arg0: i32) -> (i32, i32) {
    %c0_i32 = arith.constant 0 : i32
    %c0_i32_0 = arith.constant 0 : i32
    %c0_i32_1 = arith.constant 0 : i32
    return %c0_i32, %c0_i32_0 : i32, i32
  }
  func.func @transform_3(%arg0: i32) -> (i32, i32) {
    %c0_i32 = arith.constant 0 : i32
    %c0_i32_0 = arith.constant 0 : i32
    %c0_i32_1 = arith.constant 0 : i32
    return %c0_i32, %c0_i32_0 : i32, i32
  }
  func.func @transform_4(%arg0: i32) -> (i32, i32) {
    %c0_i32 = arith.constant 0 : i32
    %c0_i32_0 = arith.constant 0 : i32
    %c0_i32_1 = arith.constant 0 : i32
    return %c0_i32, %c0_i32_0 : i32, i32
  }
  func.func @transform_5(%arg0: i32) -> (i32, i32) {
    %c0_i32 = arith.constant 0 : i32
    %c0_i32_0 = arith.constant 0 : i32
    %c0_i32_1 = arith.constant 0 : i32
    return %c0_i32, %c0_i32_0 : i32, i32
  }
  func.func @transform_6(%arg0: i32) -> (i32, i32) {
    %c0_i32 = arith.constant 0 : i32
    %c0_i32_0 = arith.constant 0 : i32
    %c0_i32_1 = arith.constant 0 : i32
    return %c0_i32, %c0_i32_0 : i32, i32
  }
  func.func @transform_7(%arg0: i32) -> (i32, i32) {
    %c0_i32 = arith.constant 0 : i32
    %c0_i32_0 = arith.constant 0 : i32
    return %c0_i32, %arg0 : i32, i32
  }
}

</mosaic_0001>

<llo_original>
// kernel: tpu_custom_call.1
$region0: #{tpu_custom_call.1}
  #allocation0 [shape = 'u32[]', space=smem, size = 0x4, offset = 0x4, fixed_abs, tag = 'smem constant byte address 0x4 - core index']
  #allocation1 [shape = 'u32[144,128]{1,0:T(1,128)}', space=vmem, size = 0x12000, scoped, tag = 'internal scratch']
  #allocation2 [shape = 'f32[1,1]{1,0:T(1,128)S(1)}', space=vmem, size = 0x200, scoped, tag = 'scoped memory for tpu_custom_call.1']
  %s0 = inlined_call_operand.vmem [shape: f32[128,32], index: 0, kind: input, shape index: {}]
  %s1 = inlined_call_operand.vmem [shape: f32[16,32], index: 1, kind: input, shape index: {}]
  %s2 = inlined_call_operand.vmem [shape: f32[16,1], index: 2, kind: input, shape index: {}]
  %s3 = inlined_call_operand.vmem [shape: f32[8,16], index: 3, kind: input, shape index: {}]
  %s4 = inlined_call_operand.vmem [shape: f32[8,1], index: 4, kind: input, shape index: {}]
  %s5 = inlined_call_operand.vmem [shape: f32[8,1], index: 5, kind: input, shape index: {}]
  %s6 = inlined_call_operand.<no memory space> [shape: f32[1,1], index: 6, kind: input, shape index: {}]
  %s7 = inlined_call_operand.hbm [shape: f32[1,128], index: 7, kind: output, shape index: {}]
  %s8 = sld [smem:[#allocation0]]
  $region38: #{tpu_custom_call.1} parent=0
    _
  %s10 = ssub.s32 1, %s8
  %s11 = scalar_select 0, %s10, %s8
  %v12 = vstv %s6
  %13 = vst [vmem:[#allocation2] sm:$0x1] %v12
  $region1: #{tpu_custom_call.1} parent=0
    #allocation3 [shape = 'u8[512]{0}', space=vmem, size = 0x400, scoped, tag = 'output window, operand 0, single buffered']
    #allocation4 [shape = 's32[1]{0}', space=sflag, size = 0x4, scoped, tag = 'scoped memory for tpu_custom_call.1']
    %14 = vsyncpa [#allocation4], 0
    // Predicated region
    $region2: #{tpu_custom_call.1} parent=1 // pred_check
      _
    $region3: #{tpu_custom_call.1} parent=1 // pred_check_branch
      %16 = sbr.rel (0) target = $region5
    $region4: #{tpu_custom_call.1} parent=1 // pred_region
      _
    $region5: #{tpu_custom_call.1} parent=1 // pred_fallthru
      _
    // Predicated region
    $region6: #{tpu_custom_call.1} parent=1 // pred_check
      _
    $region7: #{tpu_custom_call.1} parent=1 // pred_check_branch
      %18 = sbr.rel (0) target = $region9
    $region8: #{tpu_custom_call.1} parent=1 // pred_region
      _
    $region9: #{tpu_custom_call.1} parent=1 // pred_fallthru
      _
    // Predicated region
    $region10: #{tpu_custom_call.1} parent=1 // pred_check
      _
    $region11: #{tpu_custom_call.1} parent=1 // pred_check_branch
      %20 = sbr.rel (0) target = $region13
    $region12: #{tpu_custom_call.1} parent=1 // pred_region
      _
    $region13: #{tpu_custom_call.1} parent=1 // pred_fallthru
      _
    // Predicated region
    $region14: #{tpu_custom_call.1} parent=1 // pred_check
      _
    $region15: #{tpu_custom_call.1} parent=1 // pred_check_branch
      %22 = sbr.rel (0) target = $region17
    $region16: #{tpu_custom_call.1} parent=1 // pred_region
      _
    $region17: #{tpu_custom_call.1} parent=1 // pred_fallthru
      _
    // Predicated region
    $region18: #{tpu_custom_call.1} parent=1 // pred_check
      _
    $region19: #{tpu_custom_call.1} parent=1 // pred_check_branch
      %24 = sbr.rel (0) target = $region21
    $region20: #{tpu_custom_call.1} parent=1 // pred_region
      _
    $region21: #{tpu_custom_call.1} parent=1 // pred_fallthru
      _
    // Predicated region
    $region22: #{tpu_custom_call.1} parent=1 // pred_check
      _
    $region23: #{tpu_custom_call.1} parent=1 // pred_check_branch
      %26 = sbr.rel (0) target = $region25
    $region24: #{tpu_custom_call.1} parent=1 // pred_region
      _
    $region25: #{tpu_custom_call.1} parent=1 // pred_fallthru
      _
    // Predicated region
    $region26: #{tpu_custom_call.1} parent=1 // pred_check
      _
    $region27: #{tpu_custom_call.1} parent=1 // pred_check_branch
      %28 = sbr.rel (0) target = $region29
    $region28: #{tpu_custom_call.1} parent=1 // pred_region
      _
    $region29: #{tpu_custom_call.1} parent=1 // pred_fallthru
      _
    %v29 = vld [vmem:[%s0] sm:$0xff]
    %v30 = vld [vmem:[%s0 + $0x8] sm:$0xff]
    %v31 = vld [vmem:[%s0 + $0x10] sm:$0xff]
    %v32 = vld [vmem:[%s0 + $0x18] sm:$0xff]
    %v33 = vld [vmem:[%s0 + $0x20] sm:$0xff]
    %v34 = vld [vmem:[%s0 + $0x28] sm:$0xff]
    %v35 = vld [vmem:[%s0 + $0x30] sm:$0xff]
    %v36 = vld [vmem:[%s0 + $0x38] sm:$0xff]
    %v37 = vld [vmem:[%s0 + $0x40] sm:$0xff]
    %v38 = vld [vmem:[%s0 + $0x48] sm:$0xff]
    %v39 = vld [vmem:[%s0 + $0x50] sm:$0xff]
    %v40 = vld [vmem:[%s0 + $0x58] sm:$0xff]
    %v41 = vld [vmem:[%s0 + $0x60] sm:$0xff]
    %v42 = vld [vmem:[%s0 + $0x68] sm:$0xff]
    %v43 = vld [vmem:[%s0 + $0x70] sm:$0xff]
    %v44 = vld [vmem:[%s0 + $0x78] sm:$0xff]
    %v45 = vld [vmem:[%s1] sm:$0xff]
    %v46 = vld [vmem:[%s1 + $0x8] sm:$0xff]
    %v47 = vld [vmem:[%s2] sm:$0xff]
    %v48 = vld [vmem:[%s2 + $0x8] sm:$0xff]
    %50 = vset.pattern.permute.xlu0 0
    %51 = vperm.xlu0 %50, %v47
    %v52 = vpop.permute.xlu0 %51
    %55 = vset.pattern.permute.xlu0 0
    %56 = vperm.xlu0 %55, %v48
    %v57 = vpop.permute.xlu0 %56
    %vm59 = vcmask 261120
    %v61 = vsel %vm59, %v45, 0
    %v64 = vsel %vm59, %v46, 0
    %v67 = vsel %vm59, %v29, 0
    %v70 = vsel %vm59, %v30, 0
    %v73 = vsel %vm59, %v31, 0
    %v76 = vsel %vm59, %v32, 0
    %v79 = vsel %vm59, %v33, 0
    %v82 = vsel %vm59, %v34, 0
    %v85 = vsel %vm59, %v35, 0
    %v88 = vsel %vm59, %v36, 0
    %v91 = vsel %vm59, %v37, 0
    %v94 = vsel %vm59, %v38, 0
    %v97 = vsel %vm59, %v39, 0
    %v100 = vsel %vm59, %v40, 0
    %v103 = vsel %vm59, %v41, 0
    %v106 = vsel %vm59, %v42, 0
    %v109 = vsel %vm59, %v43, 0
    %v112 = vsel %vm59, %v44, 0
    %114 = vmatprep.subr.mxu0 0.0
    %115 = vmatpush1.xpose.msra.mxu0 %v67
    %116 = vmatprep.subr.mxu0 0.0
    %117 = vmatpush1.xpose.msra.mxu0 %v70
    %118 = vmatprep.subr.mxu0 0.0
    %119 = vmatpush1.xpose.msra.mxu0 %v73
    %120 = vmatprep.subr.mxu0 0.0
    %121 = vmatpush1.xpose.msra.mxu0 %v76
    %122 = vmatprep.subr.mxu0 0.0
    %123 = vmatpush1.xpose.msra.mxu0 %v79
    %124 = vmatprep.subr.mxu0 0.0
    %125 = vmatpush1.xpose.msra.mxu0 %v82
    %126 = vmatprep.subr.mxu0 0.0
    %127 = vmatpush1.xpose.msra.mxu0 %v85
    %128 = vmatprep.subr.mxu0 0.0
    %129 = vmatpush1.xpose.msra.mxu0 %v88
    %130 = vmatprep.subr.mxu0 0.0
    %131 = vmatpush1.xpose.msra.mxu0 %v91
    %132 = vmatprep.subr.mxu0 0.0
    %133 = vmatpush1.xpose.msra.mxu0 %v94
    %134 = vmatprep.subr.mxu0 0.0
    %135 = vmatpush1.xpose.msra.mxu0 %v97
    %136 = vmatprep.subr.mxu0 0.0
    %137 = vmatpush1.xpose.msra.mxu0 %v100
    %138 = vmatprep.subr.mxu0 0.0
    %139 = vmatpush1.xpose.msra.mxu0 %v103
    %140 = vmatprep.subr.mxu0 0.0
    %141 = vmatpush1.xpose.msra.mxu0 %v106
    %142 = vmatprep.subr.mxu0 0.0
    %143 = vmatpush1.xpose.msra.mxu0 %v109
    %144 = vmatprep.subr.mxu0 0.0
    %145 = vmatpush1.xpose.msra.mxu0 %v112
    %146 = vmatprep.subr.mxu0 0.0
    %147 = vmatpush1.xpose.msra.mxu0 0.0
    %148 = vmatprep.subr.mxu0 0.0
    %149 = vmatpush1.xpose.msra.mxu0 0.0
    %150 = vmatprep.subr.mxu0 0.0
    %151 = vmatpush1.xpose.msra.mxu0 0.0
    %152 = vmatprep.subr.mxu0 0.0
    %153 = vmatpush1.xpose.msra.mxu0 0.0
    %154 = vmatprep.subr.mxu0 0.0
    %155 = vmatpush1.xpose.msra.mxu0 0.0
    %156 = vmatprep.subr.mxu0 0.0
    %157 = vmatpush1.xpose.msra.mxu0 0.0
    %158 = vmatprep.subr.mxu0 0.0
    %159 = vmatpush1.xpose.msra.mxu0 0.0
    %160 = vmatprep.subr.mxu0 0.0
    %161 = vmatpush1.xpose.msra.mxu0 0.0
    %162 = vmatprep.subr.mxu0 0.0
    %163 = vmatpush1.xpose.msra.mxu0 0.0
    %164 = vmatprep.subr.mxu0 0.0
    %165 = vmatpush1.xpose.msra.mxu0 0.0
    %166 = vmatprep.subr.mxu0 0.0
    %167 = vmatpush1.xpose.msra.mxu0 0.0
    %168 = vmatprep.subr.mxu0 0.0
    %169 = vmatpush1.xpose.msra.mxu0 0.0
    %170 = vmatprep.subr.mxu0 0.0
    %171 = vmatpush1.xpose.msra.mxu0 0.0
    %172 = vmatprep.subr.mxu0 0.0
    %173 = vmatpush1.xpose.msra.mxu0 0.0
    %174 = vmatprep.subr.mxu0 0.0
    %175 = vmatpush1.xpose.msra.mxu0 0.0
    %176 = vmatprep.subr.mxu0 0.0
    %177 = vmatpush1.xpose.msra.mxu0 0.0
    %178 = vmatprep.mubr.f32.mxu0 0.0
    %179 = vmatmul.mubr.f32.gmra.mrb[0].mxu0 %v61
    %v180 = vpop.f32.mrb[0].mxu0
    %v181 = vadd.f32 %v52, %v180
    %v182 = vpop.f32.mrb[0].mxu0
    %183 = vmatprep.mubr.f32.mxu0 0.0
    %184 = vmatmul.mubr.f32.gmra.mrb[0].mxu0 %v64
    %v185 = vpop.f32.mrb[0].mxu0
    %v186 = vadd.f32 %v57, %v185
    %v187 = vpop.f32.mrb[0].mxu0
    %188 = vdwg.mxu0
    %v189 = vmax.f32 %v181, 0.0
    %v190 = vmax.f32 %v186, 0.0
    %v191 = vld [vmem:[%s3] sm:$0xff]
    %v192 = vld [vmem:[%s4] sm:$0xff]
    %194 = vset.pattern.permute.xlu0 0
    %195 = vperm.xlu0 %194, %v192
    %v196 = vpop.permute.xlu0 %195
    %vm198 = vcmask 130048
    %v200 = vsel %vm198, %v191, 0
    %202 = vmatprep.subr.mxu0 0.0
    %203 = vmatpush1.msra.mxu0 %v189
    %204 = vmatprep.subr.mxu0 0.0
    %205 = vmatpush1.msra.mxu0 %v190
    %206 = vmatprep.subr.mxu0 0.0
    %207 = vmatpush1.msra.mxu0 0.0
    %208 = vmatprep.subr.mxu0 0.0
    %209 = vmatpush1.msra.mxu0 0.0
    %210 = vmatprep.subr.mxu0 0.0
    %211 = vmatpush1.msra.mxu0 0.0
    %212 = vmatprep.subr.mxu0 0.0
    %213 = vmatpush1.msra.mxu0 0.0
    %214 = vmatprep.subr.mxu0 0.0
    %215 = vmatpush1.msra.mxu0 0.0
    %216 = vmatprep.subr.mxu0 0.0
    %217 = vmatpush1.msra.mxu0 0.0
    %218 = vmatprep.subr.mxu0 0.0
    %219 = vmatpush1.msra.mxu0 0.0
    %220 = vmatprep.subr.mxu0 0.0
    %221 = vmatpush1.msra.mxu0 0.0
    %222 = vmatprep.subr.mxu0 0.0
    %223 = vmatpush1.msra.mxu0 0.0
    %224 = vmatprep.subr.mxu0 0.0
    %225 = vmatpush1.msra.mxu0 0.0
    %226 = vmatprep.subr.mxu0 0.0
    %227 = vmatpush1.msra.mxu0 0.0
    %228 = vmatprep.subr.mxu0 0.0
    %229 = vmatpush1.msra.mxu0 0.0
    %230 = vmatprep.subr.mxu0 0.0
    %231 = vmatpush1.msra.mxu0 0.0
    %232 = vmatprep.subr.mxu0 0.0
    %233 = vmatpush1.msra.mxu0 0.0
    %234 = vmatprep.subr.mxu0 0.0
    %235 = vmatpush1.msra.mxu0 0.0
    %236 = vmatprep.subr.mxu0 0.0
    %237 = vmatpush1.msra.mxu0 0.0
    %238 = vmatprep.subr.mxu0 0.0
    %239 = vmatpush1.msra.mxu0 0.0
    %240 = vmatprep.subr.mxu0 0.0
    %241 = vmatpush1.msra.mxu0 0.0
    %242 = vmatprep.subr.mxu0 0.0
    %243 = vmatpush1.msra.mxu0 0.0
    %244 = vmatprep.subr.mxu0 0.0
    %245 = vmatpush1.msra.mxu0 0.0
    %246 = vmatprep.subr.mxu0 0.0
    %247 = vmatpush1.msra.mxu0 0.0
    %248 = vmatprep.subr.mxu0 0.0
    %249 = vmatpush1.msra.mxu0 0.0
    %250 = vmatprep.subr.mxu0 0.0
    %251 = vmatpush1.msra.mxu0 0.0
    %252 = vmatprep.subr.mxu0 0.0
    %253 = vmatpush1.msra.mxu0 0.0
    %254 = vmatprep.subr.mxu0 0.0
    %255 = vmatpush1.msra.mxu0 0.0
    %256 = vmatprep.subr.mxu0 0.0
    %257 = vmatpush1.msra.mxu0 0.0
    %258 = vmatprep.subr.mxu0 0.0
    %259 = vmatpush1.msra.mxu0 0.0
    %260 = vmatprep.subr.mxu0 0.0
    %261 = vmatpush1.msra.mxu0 0.0
    %262 = vmatprep.subr.mxu0 0.0
    %263 = vmatpush1.msra.mxu0 0.0
    %264 = vmatprep.subr.mxu0 0.0
    %265 = vmatpush1.msra.mxu0 0.0
    %266 = vmatprep.mubr.f32.mxu0 0.0
    %267 = vmatmul.mubr.f32.gmra.mrb[0].mxu0 %v200
    %v268 = vpop.f32.mrb[0].mxu0
    %v269 = vadd.f32 %v196, %v268
    %v270 = vpop.f32.mrb[0].mxu0
    %271 = vdwg.mxu0
    %v272 = vmax.f32 %v269, 0.0
    %v273 = vld [vmem:[%s5] sm:$0xff]
    %275 = vset.pattern.permute.xlu0 0
    %276 = vperm.xlu0 %275, %v273
    %v277 = vpop.permute.xlu0 %276
    %v279 = vmul.f32 %v272, %v277
    %v280 = vrot.slane %v279, 4
    %v281 = vadd.f32 %v279, %v280
    %v282 = vrot.slane %v281, 2
    %v283 = vadd.f32 %v281, %v282
    %v284 = vrot.slane %v283, 1
    %v285 = vadd.f32 %v283, %v284
    %v286 = vld [vmem:[#allocation2] sm:$0x1]
    %288 = vset.pattern.permute.xlu0 0
    %289 = vperm.xlu0 %288, %v286
    %v290 = vpop.permute.xlu0 %289
    %v292 = vlaneseq
    %v293 = vshrl.u32 %v292, 7
    %v294 = vsub.s32 0, %v293
    %v295 = vrot.slane %v290, %v294
    %v296 = vadd.f32 %v285, %v295
    %297 = vst [vmem:[#allocation3] sm:$0x1] %v296
    // Predicated region
    $region30: #{tpu_custom_call.1} parent=1 // pred_check
      _
    $region31: #{tpu_custom_call.1} parent=1 // pred_check_branch
      %299 = sbr.rel (0) target = $region33
    $region32: #{tpu_custom_call.1} parent=1 // pred_region
      %s301 = ssub.s32 16, 16
      %302 = vsyncadd [#allocation4], %s301
      %s304 = sshll.u32 [#allocation3], 4
      %s305 = int_to_ptr.vmem [resolvable:$true] %s304
      %307 = dma.vmem_to_hbm [thread:$0]  %s305, 16, %s7, [#allocation4]
    $region33: #{tpu_custom_call.1} parent=1 // pred_fallthru
      _
    // Predicated region
    $region34: #{tpu_custom_call.1} parent=1 // pred_check
      _
    $region35: #{tpu_custom_call.1} parent=1 // pred_check_branch
      %309 = sbr.rel (0) target = $region37
    $region36: #{tpu_custom_call.1} parent=1 // pred_region
      %310 = dma.done [#allocation4], 16
    $region37: #{tpu_custom_call.1} parent=1 // pred_fallthru
      _
    %311 = vsyncpa [#allocation4], 1

</llo_original>
